<compile_context>
chip_gen: v7x
topology: tpu7x:2x2x1
jax: 0.10.0
libtpu: 0.0.40
codegen_flags: <defaults>
</compile_context>

<pallas_src>
import jax
import jax.numpy as jnp
from jax.experimental import pallas as pl
from jax.experimental.pallas import tpu as pltpu

LANE = 128


def _round_up(x, m):
    return (x + m - 1) // m * m


def _ae_kernel(x_ref,
               w1_ref, b1_ref,
               w2_ref, b2_ref,
               w3_ref, b3_ref,
               w4_ref, b4_ref,
               w5_ref, b5_ref,
               w6_ref, b6_ref,
               o_ref):
    # One batch tile per grid step; all weights/biases resident in VMEM.
    def layer(a, w_ref, b_ref, relu):
        # f32 MXU operands, f32 accumulate (matches PyTorch nn.Linear semantics).
        y = jnp.dot(a, w_ref[...], preferred_element_type=jnp.float32) + b_ref[...]
        return jnp.maximum(y, 0.0) if relu else y

    h = layer(x_ref[...], w1_ref, b1_ref, True)   # encoder_hidden_layer + relu
    h = layer(h, w2_ref, b2_ref, True)            # encoder_hidden_layer_2 + relu
    h = layer(h, w3_ref, b3_ref, True)            # encoder_output_layer + relu (code)
    h = layer(h, w4_ref, b4_ref, True)            # decoder_hidden_layer_2 + relu
    h = layer(h, w5_ref, b5_ref, True)            # decoder_hidden_layer_1 + relu
    o_ref[...] = layer(h, w6_ref, b6_ref, False).astype(o_ref.dtype)  # decoder_output_layer


def _pad_params(params):
    """Zero-pad hidden dims to 128 lanes. The first layer's input dim and the last
    layer's output dim are kept at their real sizes (they match the real x / output
    blocks)."""
    n = len(params)
    padded = []
    for idx, (w, b) in enumerate(params):
        in_d, out_d = w.shape
        in_p = in_d if idx == 0 else _round_up(in_d, LANE)
        out_p = out_d if idx == n - 1 else _round_up(out_d, LANE)
        w_p = jnp.pad(w, ((0, in_p - in_d), (0, out_p - out_d))).astype(jnp.float32)
        b_p = jnp.pad(b, ((0, 0), (0, out_p - out_d))).astype(jnp.float32)
        padded.append((w_p, b_p))
    return padded


def _choose_batch_tile(B, batch_tile):
    # Keep the batch grid at >= 2 steps when possible (v7x shards the "parallel"
    # axis across its 2 TensorCores); cap the tile at `batch_tile` rows.
    if B > 8:
        tb = min(batch_tile, _round_up(pl.cdiv(B, 2), 8))
    else:
        tb = _round_up(max(B, 1), 8)
    return max(tb, 8)


def ae_2layer_forward(x, params, *, batch_tile=2048):
    """x: [B, input_shape] float32.
    params: list of 6 (W_t, b) pairs, W_t shape (in, out), b shape (1, out), float32.
    Returns [B, input_shape] float32 reconstruction."""
    B, D = x.shape
    out_dim = params[-1][0].shape[1]
    assert out_dim == D, "autoencoder reconstructs its input width"

    # ---- batch tiling (only padding ever applied to x is along the batch axis) ----
    tb = _choose_batch_tile(B, batch_tile)
    b_pad = _round_up(B, tb)
    grid = (b_pad // tb,)
    x_p = x if b_pad == B else jnp.pad(x, ((0, b_pad - B), (0, 0)))

    # ---- weights: hidden dims lane-padded to 128, kept VMEM-resident ------------
    padded = _pad_params(params)

    flat = [x_p]
    in_specs = [pl.BlockSpec((tb, D), lambda i: (i, 0))]
    for w_p, b_p in padded:
        flat.extend([w_p, b_p])
        # Constant block index -> weights/biases stay VMEM-resident across grid steps.
        in_specs.append(pl.BlockSpec(w_p.shape, lambda i: (0, 0)))
        in_specs.append(pl.BlockSpec(b_p.shape, lambda i: (0, 0)))

    # ---- advisory cost estimate (memory-dominated) -------------------------------
    flops = 2 * b_pad * sum(int(w.shape[0]) * int(w.shape[1]) for w, _ in padded)
    bytes_accessed = (
        x_p.size * x_p.dtype.itemsize
        + sum(w.size * 4 + b.size * 4 for w, b in padded)
        + b_pad * out_dim * 4
    )
    cost = pl.CostEstimate(flops=flops, transcendentals=0,
                           bytes_accessed=int(bytes_accessed))

    out_p = pl.pallas_call(
        _ae_kernel,
        out_shape=jax.ShapeDtypeStruct((b_pad, out_dim), jnp.float32),
        grid=grid,
        in_specs=in_specs,
        out_specs=pl.BlockSpec((tb, out_dim), lambda i: (i, 0)),
        compiler_params=pltpu.CompilerParams(
            dimension_semantics=("parallel",),
            vmem_limit_bytes=32 << 20,
        ),
        cost_estimate=cost,
    )(*flat)

    return out_p if b_pad == B else out_p[:B]


def _make_params(key, dims):
    """dims: [input_shape, n_hidden_1, n_hidden_2, 2, n_hidden_2, n_hidden_1, input_shape].
    PyTorch-default-like uniform init. Weights stored transposed (in, out); biases (1, out)."""
    params = []
    for i in range(len(dims) - 1):
        fan_in, fan_out = dims[i], dims[i + 1]
        key, kw, kb = jax.random.split(key, 3)
        bound = 1.0 / jnp.sqrt(jnp.float32(fan_in))
        w_t = jax.random.uniform(kw, (fan_in, fan_out), jnp.float32, -bound, bound)
        b = jax.random.uniform(kb, (1, fan_out), jnp.float32, -bound, bound)
        params.append((w_t, b))
    return params


def _reference_forward(x, params):
    h = x
    n = len(params)
    for i, (w, b) in enumerate(params):
        h = h @ w + b
        if i != n - 1:
            h = jnp.maximum(h, 0.0)
    return h


if __name__ == "__main__":
    key = jax.random.PRNGKey(0)
    k_x, k_x2, k_p = jax.random.split(key, 3)

    input_shape = 64
    n_hidden_1 = 32
    n_hidden_2 = 16
    code_dim = 2
    dims = [input_shape, n_hidden_1, n_hidden_2, code_dim,
            n_hidden_2, n_hidden_1, input_shape]
    params = _make_params(k_p, dims)

    # Small-batch check (single grid step).
    x_small = jax.random.normal(k_x, (8, input_shape), jnp.float32)
    out_small = jax.block_until_ready(ae_2layer_forward(x_small, params))
    assert out_small.shape == (8, input_shape)
    assert jnp.allclose(out_small, _reference_forward(x_small, params),
                        atol=1e-2, rtol=1e-2), "small-batch mismatch vs f32 reference"

    # Larger batch exercising batch padding and a multi-step (>=2) pipelined grid.
    x_big = jax.random.normal(k_x2, (400, input_shape), jnp.float32)
    out_big = jax.block_until_ready(ae_2layer_forward(x_big, params))
    assert out_big.shape == (400, input_shape)
    assert jnp.allclose(out_big, _reference_forward(x_big, params),
                        atol=1e-2, rtol=1e-2), "big-batch mismatch vs f32 reference"

    print("KERNEL_OK")
</pallas_src>

<mosaic_0001>
module attributes {stable_mosaic.version = 11 : i64} {
  func.func @_ae_kernel(%arg0: i32, %arg1: memref<8x64xf32, #tpu.memory_space<vmem>>, %arg2: memref<64x128xf32, #tpu.memory_space<vmem>>, %arg3: memref<1x128xf32, #tpu.memory_space<vmem>>, %arg4: memref<128x128xf32, #tpu.memory_space<vmem>>, %arg5: memref<1x128xf32, #tpu.memory_space<vmem>>, %arg6: memref<128x128xf32, #tpu.memory_space<vmem>>, %arg7: memref<1x128xf32, #tpu.memory_space<vmem>>, %arg8: memref<128x128xf32, #tpu.memory_space<vmem>>, %arg9: memref<1x128xf32, #tpu.memory_space<vmem>>, %arg10: memref<128x128xf32, #tpu.memory_space<vmem>>, %arg11: memref<1x128xf32, #tpu.memory_space<vmem>>, %arg12: memref<128x64xf32, #tpu.memory_space<vmem>>, %arg13: memref<1x64xf32, #tpu.memory_space<vmem>>, %arg14: memref<8x64xf32, #tpu.memory_space<vmem>>) attributes {dimension_semantics = [#tpu.dimension_semantics<parallel>], iteration_bounds = array<i64: 1>, scalar_prefetch = 0 : i64, scratch_operands = 0 : i64, tpu.core_type = #tpu.core_type<tc>, window_params = [{transform_indices = @transform_0, window_bounds = array<i64: 8, 64>}, {pipeline_mode = #tpu.pipeline_mode<synchronous>, transform_indices = @transform_1, window_bounds = array<i64: 64, 128>}, {pipeline_mode = #tpu.pipeline_mode<synchronous>, transform_indices = @transform_2, window_bounds = array<i64: 1, 128>}, {pipeline_mode = #tpu.pipeline_mode<synchronous>, transform_indices = @transform_3, window_bounds = array<i64: 128, 128>}, {pipeline_mode = #tpu.pipeline_mode<synchronous>, transform_indices = @transform_4, window_bounds = array<i64: 1, 128>}, {pipeline_mode = #tpu.pipeline_mode<synchronous>, transform_indices = @transform_5, window_bounds = array<i64: 128, 128>}, {pipeline_mode = #tpu.pipeline_mode<synchronous>, transform_indices = @transform_6, window_bounds = array<i64: 1, 128>}, {pipeline_mode = #tpu.pipeline_mode<synchronous>, transform_indices = @transform_7, window_bounds = array<i64: 128, 128>}, {pipeline_mode = #tpu.pipeline_mode<synchronous>, transform_indices = @transform_8, window_bounds = array<i64: 1, 128>}, {pipeline_mode = #tpu.pipeline_mode<synchronous>, transform_indices = @transform_9, window_bounds = array<i64: 128, 128>}, {pipeline_mode = #tpu.pipeline_mode<synchronous>, transform_indices = @transform_10, window_bounds = array<i64: 1, 128>}, {pipeline_mode = #tpu.pipeline_mode<synchronous>, transform_indices = @transform_11, window_bounds = array<i64: 128, 64>}, {pipeline_mode = #tpu.pipeline_mode<synchronous>, transform_indices = @transform_12, window_bounds = array<i64: 1, 64>}, {transform_indices = @transform_13, window_bounds = array<i64: 8, 64>}]} {
    %c0 = arith.constant 0 : index
    %c0_0 = arith.constant 0 : index
    %0 = vector.load %arg1[%c0, %c0_0] : memref<8x64xf32, #tpu.memory_space<vmem>>, vector<8x64xf32>
    %c0_1 = arith.constant 0 : index
    %c0_2 = arith.constant 0 : index
    %1 = vector.load %arg2[%c0_1, %c0_2] : memref<64x128xf32, #tpu.memory_space<vmem>>, vector<64x128xf32>
    %cst = arith.constant dense<0.000000e+00> : vector<8x128xf32>
    %2 = tpu.matmul %0, %1, %cst {dimension_numbers = #tpu.dot_dimension_numbers<[1], [0], [0], [1], [0, 0, 1, 1], [], []>} : vector<8x64xf32>, vector<64x128xf32>, vector<8x128xf32> -> vector<8x128xf32>
    %c0_3 = arith.constant 0 : index
    %c0_4 = arith.constant 0 : index
    %3 = vector.load %arg3[%c0_3, %c0_4] : memref<1x128xf32, #tpu.memory_space<vmem>>, vector<1x128xf32>
    %4 = vector.broadcast %3 : vector<1x128xf32> to vector<8x128xf32>
    %5 = arith.addf %2, %4 : vector<8x128xf32>
    %cst_5 = arith.constant 0.000000e+00 : f32
    %6 = vector.broadcast %cst_5 : f32 to vector<8x128xf32>
    %7 = arith.maximumf %5, %6 : vector<8x128xf32>
    %c0_6 = arith.constant 0 : index
    %c0_7 = arith.constant 0 : index
    %8 = vector.load %arg4[%c0_6, %c0_7] : memref<128x128xf32, #tpu.memory_space<vmem>>, vector<128x128xf32>
    %cst_8 = arith.constant dense<0.000000e+00> : vector<8x128xf32>
    %9 = tpu.matmul %7, %8, %cst_8 {dimension_numbers = #tpu.dot_dimension_numbers<[1], [0], [0], [1], [0, 0, 1, 1], [], []>} : vector<8x128xf32>, vector<128x128xf32>, vector<8x128xf32> -> vector<8x128xf32>
    %c0_9 = arith.constant 0 : index
    %c0_10 = arith.constant 0 : index
    %10 = vector.load %arg5[%c0_9, %c0_10] : memref<1x128xf32, #tpu.memory_space<vmem>>, vector<1x128xf32>
    %11 = vector.broadcast %10 : vector<1x128xf32> to vector<8x128xf32>
    %12 = arith.addf %9, %11 : vector<8x128xf32>
    %cst_11 = arith.constant 0.000000e+00 : f32
    %13 = vector.broadcast %cst_11 : f32 to vector<8x128xf32>
    %14 = arith.maximumf %12, %13 : vector<8x128xf32>
    %c0_12 = arith.constant 0 : index
    %c0_13 = arith.constant 0 : index
    %15 = vector.load %arg6[%c0_12, %c0_13] : memref<128x128xf32, #tpu.memory_space<vmem>>, vector<128x128xf32>
    %cst_14 = arith.constant dense<0.000000e+00> : vector<8x128xf32>
    %16 = tpu.matmul %14, %15, %cst_14 {dimension_numbers = #tpu.dot_dimension_numbers<[1], [0], [0], [1], [0, 0, 1, 1], [], []>} : vector<8x128xf32>, vector<128x128xf32>, vector<8x128xf32> -> vector<8x128xf32>
    %c0_15 = arith.constant 0 : index
    %c0_16 = arith.constant 0 : index
    %17 = vector.load %arg7[%c0_15, %c0_16] : memref<1x128xf32, #tpu.memory_space<vmem>>, vector<1x128xf32>
    %18 = vector.broadcast %17 : vector<1x128xf32> to vector<8x128xf32>
    %19 = arith.addf %16, %18 : vector<8x128xf32>
    %cst_17 = arith.constant 0.000000e+00 : f32
    %20 = vector.broadcast %cst_17 : f32 to vector<8x128xf32>
    %21 = arith.maximumf %19, %20 : vector<8x128xf32>
    %c0_18 = arith.constant 0 : index
    %c0_19 = arith.constant 0 : index
    %22 = vector.load %arg8[%c0_18, %c0_19] : memref<128x128xf32, #tpu.memory_space<vmem>>, vector<128x128xf32>
    %cst_20 = arith.constant dense<0.000000e+00> : vector<8x128xf32>
    %23 = tpu.matmul %21, %22, %cst_20 {dimension_numbers = #tpu.dot_dimension_numbers<[1], [0], [0], [1], [0, 0, 1, 1], [], []>} : vector<8x128xf32>, vector<128x128xf32>, vector<8x128xf32> -> vector<8x128xf32>
    %c0_21 = arith.constant 0 : index
    %c0_22 = arith.constant 0 : index
    %24 = vector.load %arg9[%c0_21, %c0_22] : memref<1x128xf32, #tpu.memory_space<vmem>>, vector<1x128xf32>
    %25 = vector.broadcast %24 : vector<1x128xf32> to vector<8x128xf32>
    %26 = arith.addf %23, %25 : vector<8x128xf32>
    %cst_23 = arith.constant 0.000000e+00 : f32
    %27 = vector.broadcast %cst_23 : f32 to vector<8x128xf32>
    %28 = arith.maximumf %26, %27 : vector<8x128xf32>
    %c0_24 = arith.constant 0 : index
    %c0_25 = arith.constant 0 : index
    %29 = vector.load %arg10[%c0_24, %c0_25] : memref<128x128xf32, #tpu.memory_space<vmem>>, vector<128x128xf32>
    %cst_26 = arith.constant dense<0.000000e+00> : vector<8x128xf32>
    %30 = tpu.matmul %28, %29, %cst_26 {dimension_numbers = #tpu.dot_dimension_numbers<[1], [0], [0], [1], [0, 0, 1, 1], [], []>} : vector<8x128xf32>, vector<128x128xf32>, vector<8x128xf32> -> vector<8x128xf32>
    %c0_27 = arith.constant 0 : index
    %c0_28 = arith.constant 0 : index
    %31 = vector.load %arg11[%c0_27, %c0_28] : memref<1x128xf32, #tpu.memory_space<vmem>>, vector<1x128xf32>
    %32 = vector.broadcast %31 : vector<1x128xf32> to vector<8x128xf32>
    %33 = arith.addf %30, %32 : vector<8x128xf32>
    %cst_29 = arith.constant 0.000000e+00 : f32
    %34 = vector.broadcast %cst_29 : f32 to vector<8x128xf32>
    %35 = arith.maximumf %33, %34 : vector<8x128xf32>
    %c0_30 = arith.constant 0 : index
    %c0_31 = arith.constant 0 : index
    %36 = vector.load %arg12[%c0_30, %c0_31] : memref<128x64xf32, #tpu.memory_space<vmem>>, vector<128x64xf32>
    %cst_32 = arith.constant dense<0.000000e+00> : vector<8x64xf32>
    %37 = tpu.matmul %35, %36, %cst_32 {dimension_numbers = #tpu.dot_dimension_numbers<[1], [0], [0], [1], [0, 0, 1, 1], [], []>} : vector<8x128xf32>, vector<128x64xf32>, vector<8x64xf32> -> vector<8x64xf32>
    %c0_33 = arith.constant 0 : index
    %c0_34 = arith.constant 0 : index
    %38 = vector.load %arg13[%c0_33, %c0_34] : memref<1x64xf32, #tpu.memory_space<vmem>>, vector<1x64xf32>
    %39 = vector.broadcast %38 : vector<1x64xf32> to vector<8x64xf32>
    %40 = arith.addf %37, %39 : vector<8x64xf32>
    %c0_35 = arith.constant 0 : index
    %c0_36 = arith.constant 0 : index
    %41 = vector.load %arg14[%c0_35, %c0_36] : memref<8x64xf32, #tpu.memory_space<vmem>>, vector<8x64xf32>
    tpu.vector_store %arg14[%c0_35, %c0_36], %40 {strides = array<i32>} : memref<8x64xf32, #tpu.memory_space<vmem>>, vector<8x64xf32>,
    return
  }
  func.func @transform_0(%arg0: i32) -> (i32, i32) {
    %c0_i32 = arith.constant 0 : i32
    %c0_i32_0 = arith.constant 0 : i32
    return %arg0, %c0_i32 : i32, i32
  }
  func.func @transform_1(%arg0: i32) -> (i32, i32) {
    %c0_i32 = arith.constant 0 : i32
    %c0_i32_0 = arith.constant 0 : i32
    %c0_i32_1 = arith.constant 0 : i32
    return %c0_i32, %c0_i32_0 : i32, i32
  }
  func.func @transform_2(%arg0: i32) -> (i32, i32) {
    %c0_i32 = arith.constant 0 : i32
    %c0_i32_0 = arith.constant 0 : i32
    %c0_i32_1 = arith.constant 0 : i32
    return %c0_i32, %c0_i32_0 : i32, i32
  }
  func.func @transform_3(%arg0: i32) -> (i32, i32) {
    %c0_i32 = arith.constant 0 : i32
    %c0_i32_0 = arith.constant 0 : i32
    %c0_i32_1 = arith.constant 0 : i32
    return %c0_i32, %c0_i32_0 : i32, i32
  }
  func.func @transform_4(%arg0: i32) -> (i32, i32) {
    %c0_i32 = arith.constant 0 : i32
    %c0_i32_0 = arith.constant 0 : i32
    %c0_i32_1 = arith.constant 0 : i32
    return %c0_i32, %c0_i32_0 : i32, i32
  }
  func.func @transform_5(%arg0: i32) -> (i32, i32) {
    %c0_i32 = arith.constant 0 : i32
    %c0_i32_0 = arith.constant 0 : i32
    %c0_i32_1 = arith.constant 0 : i32
    return %c0_i32, %c0_i32_0 : i32, i32
  }
  func.func @transform_6(%arg0: i32) -> (i32, i32) {
    %c0_i32 = arith.constant 0 : i32
    %c0_i32_0 = arith.constant 0 : i32
    %c0_i32_1 = arith.constant 0 : i32
    return %c0_i32, %c0_i32_0 : i32, i32
  }
  func.func @transform_7(%arg0: i32) -> (i32, i32) {
    %c0_i32 = arith.constant 0 : i32
    %c0_i32_0 = arith.constant 0 : i32
    %c0_i32_1 = arith.constant 0 : i32
    return %c0_i32, %c0_i32_0 : i32, i32
  }
  func.func @transform_8(%arg0: i32) -> (i32, i32) {
    %c0_i32 = arith.constant 0 : i32
    %c0_i32_0 = arith.constant 0 : i32
    %c0_i32_1 = arith.constant 0 : i32
    return %c0_i32, %c0_i32_0 : i32, i32
  }
  func.func @transform_9(%arg0: i32) -> (i32, i32) {
    %c0_i32 = arith.constant 0 : i32
    %c0_i32_0 = arith.constant 0 : i32
    %c0_i32_1 = arith.constant 0 : i32
    return %c0_i32, %c0_i32_0 : i32, i32
  }
  func.func @transform_10(%arg0: i32) -> (i32, i32) {
    %c0_i32 = arith.constant 0 : i32
    %c0_i32_0 = arith.constant 0 : i32
    %c0_i32_1 = arith.constant 0 : i32
    return %c0_i32, %c0_i32_0 : i32, i32
  }
  func.func @transform_11(%arg0: i32) -> (i32, i32) {
    %c0_i32 = arith.constant 0 : i32
    %c0_i32_0 = arith.constant 0 : i32
    %c0_i32_1 = arith.constant 0 : i32
    return %c0_i32, %c0_i32_0 : i32, i32
  }
  func.func @transform_12(%arg0: i32) -> (i32, i32) {
    %c0_i32 = arith.constant 0 : i32
    %c0_i32_0 = arith.constant 0 : i32
    %c0_i32_1 = arith.constant 0 : i32
    return %c0_i32, %c0_i32_0 : i32, i32
  }
  func.func @transform_13(%arg0: i32) -> (i32, i32) {
    %c0_i32 = arith.constant 0 : i32
    %c0_i32_0 = arith.constant 0 : i32
    return %arg0, %c0_i32 : i32, i32
  }
}

</mosaic_0001>

<llo_original>
// kernel: tpu_custom_call.1
$region0: #{tpu_custom_call.1}
  #allocation0 [shape = 'u32[]', space=smem, size = 0x4, offset = 0x4, fixed_abs, tag = 'smem constant byte address 0x4 - core index']
  #allocation1 [shape = 'u32[144,128]{1,0:T(1,128)}', space=vmem, size = 0x12000, scoped, tag = 'internal scratch']
  %s0 = inlined_call_operand.vmem [shape: f32[8,64], index: 0, kind: input, shape index: {}]
  %s1 = inlined_call_operand.vmem [shape: f32[64,128], index: 1, kind: input, shape index: {}]
  %s2 = inlined_call_operand.vmem [shape: f32[1,128], index: 2, kind: input, shape index: {}]
  %s3 = inlined_call_operand.vmem [shape: f32[128,128], index: 3, kind: input, shape index: {}]
  %s4 = inlined_call_operand.vmem [shape: f32[1,128], index: 4, kind: input, shape index: {}]
  %s5 = inlined_call_operand.hbm [shape: f32[128,128], index: 5, kind: input, shape index: {}]
  %s6 = inlined_call_operand.vmem [shape: f32[1,128], index: 6, kind: input, shape index: {}]
  %s7 = inlined_call_operand.hbm [shape: f32[128,128], index: 7, kind: input, shape index: {}]
  %s8 = inlined_call_operand.vmem [shape: f32[1,128], index: 8, kind: input, shape index: {}]
  %s9 = inlined_call_operand.hbm [shape: f32[128,128], index: 9, kind: input, shape index: {}]
  %s10 = inlined_call_operand.vmem [shape: f32[1,128], index: 10, kind: input, shape index: {}]
  %s11 = inlined_call_operand.vmem [shape: f32[128,64], index: 11, kind: input, shape index: {}]
  %s12 = inlined_call_operand.vmem [shape: f32[1,64], index: 12, kind: input, shape index: {}]
  %s13 = inlined_call_operand.hbm [shape: f32[8,64], index: 13, kind: output, shape index: {}]
  %s14 = sld [smem:[#allocation0]]
  $region74: #{tpu_custom_call.1} parent=0
    _
  %s16 = ssub.s32 1, %s14
  %s17 = scalar_select 0, %s16, %s14
  $region1: #{tpu_custom_call.1} parent=0
    #allocation2 [shape = 'u8[65536]{0}', space=vmem, size = 0x10000, scoped, tag = 'input window, operand 5, single buffered']
    #allocation3 [shape = 's32[1]{0}', space=sflag, size = 0x4, scoped, tag = 'scoped memory for tpu_custom_call.1']
    #allocation4 [shape = 's32[1]{0}', space=sflag, size = 0x4, scoped, tag = 'scoped memory for tpu_custom_call.1']
    #allocation5 [shape = 'u8[65536]{0}', space=vmem, size = 0x10000, scoped, tag = 'input window, operand 7, single buffered']
    #allocation6 [shape = 's32[1]{0}', space=sflag, size = 0x4, scoped, tag = 'scoped memory for tpu_custom_call.1']
    #allocation7 [shape = 'u8[65536]{0}', space=vmem, size = 0x10000, scoped, tag = 'input window, operand 9, single buffered']
    #allocation8 [shape = 'u8[4096]{0}', space=vmem, size = 0x1000, scoped, tag = 'output window, operand 0, single buffered']
    %18 = vsyncpa [#allocation3], 0
    %19 = vsyncpa [#allocation6], 0
    %20 = vsyncpa [#allocation4], 0
    // Predicated region
    $region2: #{tpu_custom_call.1} parent=1 // pred_check
      _
    $region3: #{tpu_custom_call.1} parent=1 // pred_check_branch
      %22 = sbr.rel (0) target = $region5
    $region4: #{tpu_custom_call.1} parent=1 // pred_region
      _
    $region5: #{tpu_custom_call.1} parent=1 // pred_fallthru
      _
    // Predicated region
    $region6: #{tpu_custom_call.1} parent=1 // pred_check
      _
    $region7: #{tpu_custom_call.1} parent=1 // pred_check_branch
      %24 = sbr.rel (0) target = $region9
    $region8: #{tpu_custom_call.1} parent=1 // pred_region
      _
    $region9: #{tpu_custom_call.1} parent=1 // pred_fallthru
      _
    // Predicated region
    $region10: #{tpu_custom_call.1} parent=1 // pred_check
      _
    $region11: #{tpu_custom_call.1} parent=1 // pred_check_branch
      %26 = sbr.rel (0) target = $region13
    $region12: #{tpu_custom_call.1} parent=1 // pred_region
      _
    $region13: #{tpu_custom_call.1} parent=1 // pred_fallthru
      _
    // Predicated region
    $region14: #{tpu_custom_call.1} parent=1 // pred_check
      _
    $region15: #{tpu_custom_call.1} parent=1 // pred_check_branch
      %28 = sbr.rel (0) target = $region17
    $region16: #{tpu_custom_call.1} parent=1 // pred_region
      _
    $region17: #{tpu_custom_call.1} parent=1 // pred_fallthru
      _
    // Predicated region
    $region18: #{tpu_custom_call.1} parent=1 // pred_check
      _
    $region19: #{tpu_custom_call.1} parent=1 // pred_check_branch
      %30 = sbr.rel (0) target = $region21
    $region20: #{tpu_custom_call.1} parent=1 // pred_region
      _
    $region21: #{tpu_custom_call.1} parent=1 // pred_fallthru
      _
    // Predicated region
    $region22: #{tpu_custom_call.1} parent=1 // pred_check
      _
    $region23: #{tpu_custom_call.1} parent=1 // pred_check_branch
      %32 = sbr.rel (0) target = $region25
    $region24: #{tpu_custom_call.1} parent=1 // pred_region
      %s34 = ssub.s32 2048, 2048
      %35 = vsyncadd [#allocation3], %s34
      %s36 = sshll.u32 [#allocation2], 4
      %s37 = int_to_ptr.vmem [resolvable:$true] %s36
      %42 = dma.hbm_to_vmem [thread:$0]  %s5, 2048, %s37, [#allocation3], 128, 128, 8
    $region25: #{tpu_custom_call.1} parent=1 // pred_fallthru
      _
    // Predicated region
    $region26: #{tpu_custom_call.1} parent=1 // pred_check
      _
    $region27: #{tpu_custom_call.1} parent=1 // pred_check_branch
      %44 = sbr.rel (0) target = $region29
    $region28: #{tpu_custom_call.1} parent=1 // pred_region
      _
    $region29: #{tpu_custom_call.1} parent=1 // pred_fallthru
      _
    // Predicated region
    $region30: #{tpu_custom_call.1} parent=1 // pred_check
      _
    $region31: #{tpu_custom_call.1} parent=1 // pred_check_branch
      %46 = sbr.rel (0) target = $region33
    $region32: #{tpu_custom_call.1} parent=1 // pred_region
      %s48 = ssub.s32 2048, 2048
      %49 = vsyncadd [#allocation6], %s48
      %s50 = sshll.u32 [#allocation5], 4
      %s51 = int_to_ptr.vmem [resolvable:$true] %s50
      %56 = dma.hbm_to_vmem [thread:$0]  %s7, 2048, %s51, [#allocation6], 128, 128, 8
    $region33: #{tpu_custom_call.1} parent=1 // pred_fallthru
      _
    // Predicated region
    $region34: #{tpu_custom_call.1} parent=1 // pred_check
      _
    $region35: #{tpu_custom_call.1} parent=1 // pred_check_branch
      %58 = sbr.rel (0) target = $region37
    $region36: #{tpu_custom_call.1} parent=1 // pred_region
      _
    $region37: #{tpu_custom_call.1} parent=1 // pred_fallthru
      _
    // Predicated region
    $region38: #{tpu_custom_call.1} parent=1 // pred_check
      _
    $region39: #{tpu_custom_call.1} parent=1 // pred_check_branch
      %60 = sbr.rel (0) target = $region41
    $region40: #{tpu_custom_call.1} parent=1 // pred_region
      %s62 = ssub.s32 2048, 2048
      %63 = vsyncadd [#allocation6], %s62
      %s64 = sshll.u32 [#allocation7], 4
      %s65 = int_to_ptr.vmem [resolvable:$true] %s64
      %70 = dma.hbm_to_vmem [thread:$0]  %s9, 2048, %s65, [#allocation6], 128, 128, 8
    $region41: #{tpu_custom_call.1} parent=1 // pred_fallthru
      _
    // Predicated region
    $region42: #{tpu_custom_call.1} parent=1 // pred_check
      _
    $region43: #{tpu_custom_call.1} parent=1 // pred_check_branch
      %72 = sbr.rel (0) target = $region45
    $region44: #{tpu_custom_call.1} parent=1 // pred_region
      _
    $region45: #{tpu_custom_call.1} parent=1 // pred_fallthru
      _
    // Predicated region
    $region46: #{tpu_custom_call.1} parent=1 // pred_check
      _
    $region47: #{tpu_custom_call.1} parent=1 // pred_check_branch
      %74 = sbr.rel (0) target = $region49
    $region48: #{tpu_custom_call.1} parent=1 // pred_region
      _
    $region49: #{tpu_custom_call.1} parent=1 // pred_fallthru
      _
    // Predicated region
    $region50: #{tpu_custom_call.1} parent=1 // pred_check
      _
    $region51: #{tpu_custom_call.1} parent=1 // pred_check_branch
      %76 = sbr.rel (0) target = $region53
    $region52: #{tpu_custom_call.1} parent=1 // pred_region
      _
    $region53: #{tpu_custom_call.1} parent=1 // pred_fallthru
      _
    // Predicated region
    $region54: #{tpu_custom_call.1} parent=1 // pred_check
      _
    $region55: #{tpu_custom_call.1} parent=1 // pred_check_branch
      %78 = sbr.rel (0) target = $region57
    $region56: #{tpu_custom_call.1} parent=1 // pred_region
      %79 = dma.done [#allocation3], 2048
    $region57: #{tpu_custom_call.1} parent=1 // pred_fallthru
      _
    // Predicated region
    $region58: #{tpu_custom_call.1} parent=1 // pred_check
      _
    $region59: #{tpu_custom_call.1} parent=1 // pred_check_branch
      %81 = sbr.rel (0) target = $region61
    $region60: #{tpu_custom_call.1} parent=1 // pred_region
      %82 = dma.done [#allocation6], 2048
    $region61: #{tpu_custom_call.1} parent=1 // pred_fallthru
      _
    // Predicated region
    $region62: #{tpu_custom_call.1} parent=1 // pred_check
      _
    $region63: #{tpu_custom_call.1} parent=1 // pred_check_branch
      %84 = sbr.rel (0) target = $region65
    $region64: #{tpu_custom_call.1} parent=1 // pred_region
      %85 = dma.done [#allocation6], 2048
    $region65: #{tpu_custom_call.1} parent=1 // pred_fallthru
      _
    %v86 = vld [vmem:[%s0] sm:$0xff]
    %v87 = vld [vmem:[%s1] sm:$0xff]
    %v88 = vld [vmem:[%s1 + $0x8] sm:$0xff]
    %v89 = vld [vmem:[%s1 + $0x10] sm:$0xff]
    %v90 = vld [vmem:[%s1 + $0x18] sm:$0xff]
    %v91 = vld [vmem:[%s1 + $0x20] sm:$0xff]
    %v92 = vld [vmem:[%s1 + $0x28] sm:$0xff]
    %v93 = vld [vmem:[%s1 + $0x30] sm:$0xff]
    %v94 = vld [vmem:[%s1 + $0x38] sm:$0xff]
    %v95 = vld [vmem:[%s2] sm:$0x1]
    %v97 = vlaneseq
    %v98 = vshrl.u32 %v97, 7
    %v99 = vsub.s32 0, %v98
    %v100 = vrot.slane %v95, %v99
    %vm102 = vcmask 523264
    %v104 = vsel %vm102, %v86, 0
    %106 = vmatprep.subr.mxu0 0.0
    %107 = vmatpush1.msra.mxu0 %v87
    %108 = vmatprep.subr.mxu0 0.0
    %109 = vmatpush1.msra.mxu0 %v88
    %110 = vmatprep.subr.mxu0 0.0
    %111 = vmatpush1.msra.mxu0 %v89
    %112 = vmatprep.subr.mxu0 0.0
    %113 = vmatpush1.msra.mxu0 %v90
    %114 = vmatprep.subr.mxu0 0.0
    %115 = vmatpush1.msra.mxu0 %v91
    %116 = vmatprep.subr.mxu0 0.0
    %117 = vmatpush1.msra.mxu0 %v92
    %118 = vmatprep.subr.mxu0 0.0
    %119 = vmatpush1.msra.mxu0 %v93
    %120 = vmatprep.subr.mxu0 0.0
    %121 = vmatpush1.msra.mxu0 %v94
    %122 = vmatprep.subr.mxu0 0.0
    %123 = vmatpush1.msra.mxu0 0.0
    %124 = vmatprep.subr.mxu0 0.0
    %125 = vmatpush1.msra.mxu0 0.0
    %126 = vmatprep.subr.mxu0 0.0
    %127 = vmatpush1.msra.mxu0 0.0
    %128 = vmatprep.subr.mxu0 0.0
    %129 = vmatpush1.msra.mxu0 0.0
    %130 = vmatprep.subr.mxu0 0.0
    %131 = vmatpush1.msra.mxu0 0.0
    %132 = vmatprep.subr.mxu0 0.0
    %133 = vmatpush1.msra.mxu0 0.0
    %134 = vmatprep.subr.mxu0 0.0
    %135 = vmatpush1.msra.mxu0 0.0
    %136 = vmatprep.subr.mxu0 0.0
    %137 = vmatpush1.msra.mxu0 0.0
    %138 = vmatprep.subr.mxu0 0.0
    %139 = vmatpush1.msra.mxu0 0.0
    %140 = vmatprep.subr.mxu0 0.0
    %141 = vmatpush1.msra.mxu0 0.0
    %142 = vmatprep.subr.mxu0 0.0
    %143 = vmatpush1.msra.mxu0 0.0
    %144 = vmatprep.subr.mxu0 0.0
    %145 = vmatpush1.msra.mxu0 0.0
    %146 = vmatprep.subr.mxu0 0.0
    %147 = vmatpush1.msra.mxu0 0.0
    %148 = vmatprep.subr.mxu0 0.0
    %149 = vmatpush1.msra.mxu0 0.0
    %150 = vmatprep.subr.mxu0 0.0
    %151 = vmatpush1.msra.mxu0 0.0
    %152 = vmatprep.subr.mxu0 0.0
    %153 = vmatpush1.msra.mxu0 0.0
    %154 = vmatprep.subr.mxu0 0.0
    %155 = vmatpush1.msra.mxu0 0.0
    %156 = vmatprep.subr.mxu0 0.0
    %157 = vmatpush1.msra.mxu0 0.0
    %158 = vmatprep.subr.mxu0 0.0
    %159 = vmatpush1.msra.mxu0 0.0
    %160 = vmatprep.subr.mxu0 0.0
    %161 = vmatpush1.msra.mxu0 0.0
    %162 = vmatprep.subr.mxu0 0.0
    %163 = vmatpush1.msra.mxu0 0.0
    %164 = vmatprep.subr.mxu0 0.0
    %165 = vmatpush1.msra.mxu0 0.0
    %166 = vmatprep.subr.mxu0 0.0
    %167 = vmatpush1.msra.mxu0 0.0
    %168 = vmatprep.subr.mxu0 0.0
    %169 = vmatpush1.msra.mxu0 0.0
    %170 = vmatprep.mubr.f32.mxu0 0.0
    %171 = vmatmul.mubr.f32.gmra.mrb[0].mxu0 %v104
    %v172 = vpop.f32.mrb[0].mxu0
    %v173 = vadd.f32 %v100, %v172
    %v174 = vpop.f32.mrb[0].mxu0
    %175 = vdwg.mxu0
    %v176 = vmax.f32 %v173, 0.0
    %v177 = vld [vmem:[%s3] sm:$0xff]
    %v178 = vld [vmem:[%s3 + $0x8] sm:$0xff]
    %v179 = vld [vmem:[%s3 + $0x10] sm:$0xff]
    %v180 = vld [vmem:[%s3 + $0x18] sm:$0xff]
    %v181 = vld [vmem:[%s3 + $0x20] sm:$0xff]
    %v182 = vld [vmem:[%s3 + $0x28] sm:$0xff]
    %v183 = vld [vmem:[%s3 + $0x30] sm:$0xff]
    %v184 = vld [vmem:[%s3 + $0x38] sm:$0xff]
    %v185 = vld [vmem:[%s3 + $0x40] sm:$0xff]
    %v186 = vld [vmem:[%s3 + $0x48] sm:$0xff]
    %v187 = vld [vmem:[%s3 + $0x50] sm:$0xff]
    %v188 = vld [vmem:[%s3 + $0x58] sm:$0xff]
    %v189 = vld [vmem:[%s3 + $0x60] sm:$0xff]
    %v190 = vld [vmem:[%s3 + $0x68] sm:$0xff]
    %v191 = vld [vmem:[%s3 + $0x70] sm:$0xff]
    %v192 = vld [vmem:[%s3 + $0x78] sm:$0xff]
    %v193 = vld [vmem:[%s4] sm:$0x1]
    %v195 = vlaneseq
    %v196 = vshrl.u32 %v195, 7
    %v197 = vsub.s32 0, %v196
    %v198 = vrot.slane %v193, %v197
    %200 = vmatprep.subr.mxu0 0.0
    %201 = vmatpush1.msra.mxu0 %v177
    %202 = vmatprep.subr.mxu0 0.0
    %203 = vmatpush1.msra.mxu0 %v178
    %204 = vmatprep.subr.mxu0 0.0
    %205 = vmatpush1.msra.mxu0 %v179
    %206 = vmatprep.subr.mxu0 0.0
    %207 = vmatpush1.msra.mxu0 %v180
    %208 = vmatprep.subr.mxu0 0.0
    %209 = vmatpush1.msra.mxu0 %v181
    %210 = vmatprep.subr.mxu0 0.0
    %211 = vmatpush1.msra.mxu0 %v182
    %212 = vmatprep.subr.mxu0 0.0
    %213 = vmatpush1.msra.mxu0 %v183
    %214 = vmatprep.subr.mxu0 0.0
    %215 = vmatpush1.msra.mxu0 %v184
    %216 = vmatprep.subr.mxu0 0.0
    %217 = vmatpush1.msra.mxu0 %v185
    %218 = vmatprep.subr.mxu0 0.0
    %219 = vmatpush1.msra.mxu0 %v186
    %220 = vmatprep.subr.mxu0 0.0
    %221 = vmatpush1.msra.mxu0 %v187
    %222 = vmatprep.subr.mxu0 0.0
    %223 = vmatpush1.msra.mxu0 %v188
    %224 = vmatprep.subr.mxu0 0.0
    %225 = vmatpush1.msra.mxu0 %v189
    %226 = vmatprep.subr.mxu0 0.0
    %227 = vmatpush1.msra.mxu0 %v190
    %228 = vmatprep.subr.mxu0 0.0
    %229 = vmatpush1.msra.mxu0 %v191
    %230 = vmatprep.subr.mxu0 0.0
    %231 = vmatpush1.msra.mxu0 %v192
    %232 = vmatprep.subr.mxu0 0.0
    %233 = vmatpush1.msra.mxu0 0.0
    %234 = vmatprep.subr.mxu0 0.0
    %235 = vmatpush1.msra.mxu0 0.0
    %236 = vmatprep.subr.mxu0 0.0
    %237 = vmatpush1.msra.mxu0 0.0
    %238 = vmatprep.subr.mxu0 0.0
    %239 = vmatpush1.msra.mxu0 0.0
    %240 = vmatprep.subr.mxu0 0.0
    %241 = vmatpush1.msra.mxu0 0.0
    %242 = vmatprep.subr.mxu0 0.0
    %243 = vmatpush1.msra.mxu0 0.0
    %244 = vmatprep.subr.mxu0 0.0
    %245 = vmatpush1.msra.mxu0 0.0
    %246 = vmatprep.subr.mxu0 0.0
    %247 = vmatpush1.msra.mxu0 0.0
    %248 = vmatprep.subr.mxu0 0.0
    %249 = vmatpush1.msra.mxu0 0.0
    %250 = vmatprep.subr.mxu0 0.0
    %251 = vmatpush1.msra.mxu0 0.0
    %252 = vmatprep.subr.mxu0 0.0
    %253 = vmatpush1.msra.mxu0 0.0
    %254 = vmatprep.subr.mxu0 0.0
    %255 = vmatpush1.msra.mxu0 0.0
    %256 = vmatprep.subr.mxu0 0.0
    %257 = vmatpush1.msra.mxu0 0.0
    %258 = vmatprep.subr.mxu0 0.0
    %259 = vmatpush1.msra.mxu0 0.0
    %260 = vmatprep.subr.mxu0 0.0
    %261 = vmatpush1.msra.mxu0 0.0
    %262 = vmatprep.subr.mxu0 0.0
    %263 = vmatpush1.msra.mxu0 0.0
    %264 = vmatprep.mubr.f32.mxu0 0.0
    %265 = vmatmul.mubr.f32.gmra.mrb[0].mxu0 %v176
    %v266 = vpop.f32.mrb[0].mxu0
    %v267 = vadd.f32 %v198, %v266
    %v268 = vpop.f32.mrb[0].mxu0
    %269 = vdwg.mxu0
    %v270 = vmax.f32 %v267, 0.0
    %v271 = vld [vmem:[#allocation2] sm:$0xff]
    %v272 = vld [vmem:[#allocation2 + $0x8] sm:$0xff]
    %v273 = vld [vmem:[#allocation2 + $0x10] sm:$0xff]
    %v274 = vld [vmem:[#allocation2 + $0x18] sm:$0xff]
    %v275 = vld [vmem:[#allocation2 + $0x20] sm:$0xff]
    %v276 = vld [vmem:[#allocation2 + $0x28] sm:$0xff]
    %v277 = vld [vmem:[#allocation2 + $0x30] sm:$0xff]
    %v278 = vld [vmem:[#allocation2 + $0x38] sm:$0xff]
    %v279 = vld [vmem:[#allocation2 + $0x40] sm:$0xff]
    %v280 = vld [vmem:[#allocation2 + $0x48] sm:$0xff]
    %v281 = vld [vmem:[#allocation2 + $0x50] sm:$0xff]
    %v282 = vld [vmem:[#allocation2 + $0x58] sm:$0xff]
    %v283 = vld [vmem:[#allocation2 + $0x60] sm:$0xff]
    %v284 = vld [vmem:[#allocation2 + $0x68] sm:$0xff]
    %v285 = vld [vmem:[#allocation2 + $0x70] sm:$0xff]
    %v286 = vld [vmem:[#allocation2 + $0x78] sm:$0xff]
    %v287 = vld [vmem:[%s6] sm:$0x1]
    %v289 = vlaneseq
    %v290 = vshrl.u32 %v289, 7
    %v291 = vsub.s32 0, %v290
    %v292 = vrot.slane %v287, %v291
    %294 = vmatprep.subr.mxu0 0.0
    %295 = vmatpush1.msra.mxu0 %v271
    %296 = vmatprep.subr.mxu0 0.0
    %297 = vmatpush1.msra.mxu0 %v272
    %298 = vmatprep.subr.mxu0 0.0
    %299 = vmatpush1.msra.mxu0 %v273
    %300 = vmatprep.subr.mxu0 0.0
    %301 = vmatpush1.msra.mxu0 %v274
    %302 = vmatprep.subr.mxu0 0.0
    %303 = vmatpush1.msra.mxu0 %v275
    %304 = vmatprep.subr.mxu0 0.0
    %305 = vmatpush1.msra.mxu0 %v276
    %306 = vmatprep.subr.mxu0 0.0
    %307 = vmatpush1.msra.mxu0 %v277
    %308 = vmatprep.subr.mxu0 0.0
    %309 = vmatpush1.msra.mxu0 %v278
    %310 = vmatprep.subr.mxu0 0.0
    %311 = vmatpush1.msra.mxu0 %v279
    %312 = vmatprep.subr.mxu0 0.0
    %313 = vmatpush1.msra.mxu0 %v280
    %314 = vmatprep.subr.mxu0 0.0
    %315 = vmatpush1.msra.mxu0 %v281
    %316 = vmatprep.subr.mxu0 0.0
    %317 = vmatpush1.msra.mxu0 %v282
    %318 = vmatprep.subr.mxu0 0.0
    %319 = vmatpush1.msra.mxu0 %v283
    %320 = vmatprep.subr.mxu0 0.0
    %321 = vmatpush1.msra.mxu0 %v284
    %322 = vmatprep.subr.mxu0 0.0
    %323 = vmatpush1.msra.mxu0 %v285
    %324 = vmatprep.subr.mxu0 0.0
    %325 = vmatpush1.msra.mxu0 %v286
    %326 = vmatprep.subr.mxu0 0.0
    %327 = vmatpush1.msra.mxu0 0.0
    %328 = vmatprep.subr.mxu0 0.0
    %329 = vmatpush1.msra.mxu0 0.0
    %330 = vmatprep.subr.mxu0 0.0
    %331 = vmatpush1.msra.mxu0 0.0
    %332 = vmatprep.subr.mxu0 0.0
    %333 = vmatpush1.msra.mxu0 0.0
    %334 = vmatprep.subr.mxu0 0.0
    %335 = vmatpush1.msra.mxu0 0.0
    %336 = vmatprep.subr.mxu0 0.0
    %337 = vmatpush1.msra.mxu0 0.0
    %338 = vmatprep.subr.mxu0 0.0
    %339 = vmatpush1.msra.mxu0 0.0
    %340 = vmatprep.subr.mxu0 0.0
    %341 = vmatpush1.msra.mxu0 0.0
    %342 = vmatprep.subr.mxu0 0.0
    %343 = vmatpush1.msra.mxu0 0.0
    %344 = vmatprep.subr.mxu0 0.0
    %345 = vmatpush1.msra.mxu0 0.0
    %346 = vmatprep.subr.mxu0 0.0
    %347 = vmatpush1.msra.mxu0 0.0
    %348 = vmatprep.subr.mxu0 0.0
    %349 = vmatpush1.msra.mxu0 0.0
    %350 = vmatprep.subr.mxu0 0.0
    %351 = vmatpush1.msra.mxu0 0.0
    %352 = vmatprep.subr.mxu0 0.0
    %353 = vmatpush1.msra.mxu0 0.0
    %354 = vmatprep.subr.mxu0 0.0
    %355 = vmatpush1.msra.mxu0 0.0
    %356 = vmatprep.subr.mxu0 0.0
    %357 = vmatpush1.msra.mxu0 0.0
    %358 = vmatprep.mubr.f32.mxu0 0.0
    %359 = vmatmul.mubr.f32.gmra.mrb[0].mxu0 %v270
    %v360 = vpop.f32.mrb[0].mxu0
    %v361 = vadd.f32 %v292, %v360
    %v362 = vpop.f32.mrb[0].mxu0
    %363 = vdwg.mxu0
    %v364 = vmax.f32 %v361, 0.0
    %v365 = vld [vmem:[#allocation5] sm:$0xff]
    %v366 = vld [vmem:[#allocation5 + $0x8] sm:$0xff]
    %v367 = vld [vmem:[#allocation5 + $0x10] sm:$0xff]
    %v368 = vld [vmem:[#allocation5 + $0x18] sm:$0xff]
    %v369 = vld [vmem:[#allocation5 + $0x20] sm:$0xff]
    %v370 = vld [vmem:[#allocation5 + $0x28] sm:$0xff]
    %v371 = vld [vmem:[#allocation5 + $0x30] sm:$0xff]
    %v372 = vld [vmem:[#allocation5 + $0x38] sm:$0xff]
    %v373 = vld [vmem:[#allocation5 + $0x40] sm:$0xff]
    %v374 = vld [vmem:[#allocation5 + $0x48] sm:$0xff]
    %v375 = vld [vmem:[#allocation5 + $0x50] sm:$0xff]
    %v376 = vld [vmem:[#allocation5 + $0x58] sm:$0xff]
    %v377 = vld [vmem:[#allocation5 + $0x60] sm:$0xff]
    %v378 = vld [vmem:[#allocation5 + $0x68] sm:$0xff]
    %v379 = vld [vmem:[#allocation5 + $0x70] sm:$0xff]
    %v380 = vld [vmem:[#allocation5 + $0x78] sm:$0xff]
    %v381 = vld [vmem:[%s8] sm:$0x1]
    %v383 = vlaneseq
    %v384 = vshrl.u32 %v383, 7
    %v385 = vsub.s32 0, %v384
    %v386 = vrot.slane %v381, %v385
    %388 = vmatprep.subr.mxu0 0.0
    %389 = vmatpush1.msra.mxu0 %v365
    %390 = vmatprep.subr.mxu0 0.0
    %391 = vmatpush1.msra.mxu0 %v366
    %392 = vmatprep.subr.mxu0 0.0
    %393 = vmatpush1.msra.mxu0 %v367
    %394 = vmatprep.subr.mxu0 0.0
    %395 = vmatpush1.msra.mxu0 %v368
    %396 = vmatprep.subr.mxu0 0.0
    %397 = vmatpush1.msra.mxu0 %v369
    %398 = vmatprep.subr.mxu0 0.0
    %399 = vmatpush1.msra.mxu0 %v370
    %400 = vmatprep.subr.mxu0 0.0
    %401 = vmatpush1.msra.mxu0 %v371
    %402 = vmatprep.subr.mxu0 0.0
    %403 = vmatpush1.msra.mxu0 %v372
    %404 = vmatprep.subr.mxu0 0.0
    %405 = vmatpush1.msra.mxu0 %v373
    %406 = vmatprep.subr.mxu0 0.0
    %407 = vmatpush1.msra.mxu0 %v374
    %408 = vmatprep.subr.mxu0 0.0
    %409 = vmatpush1.msra.mxu0 %v375
    %410 = vmatprep.subr.mxu0 0.0
    %411 = vmatpush1.msra.mxu0 %v376
    %412 = vmatprep.subr.mxu0 0.0
    %413 = vmatpush1.msra.mxu0 %v377
    %414 = vmatprep.subr.mxu0 0.0
    %415 = vmatpush1.msra.mxu0 %v378
    %416 = vmatprep.subr.mxu0 0.0
    %417 = vmatpush1.msra.mxu0 %v379
    %418 = vmatprep.subr.mxu0 0.0
    %419 = vmatpush1.msra.mxu0 %v380
    %420 = vmatprep.subr.mxu0 0.0
    %421 = vmatpush1.msra.mxu0 0.0
    %422 = vmatprep.subr.mxu0 0.0
    %423 = vmatpush1.msra.mxu0 0.0
    %424 = vmatprep.subr.mxu0 0.0
    %425 = vmatpush1.msra.mxu0 0.0
    %426 = vmatprep.subr.mxu0 0.0
    %427 = vmatpush1.msra.mxu0 0.0
    %428 = vmatprep.subr.mxu0 0.0
    %429 = vmatpush1.msra.mxu0 0.0
    %430 = vmatprep.subr.mxu0 0.0
    %431 = vmatpush1.msra.mxu0 0.0
    %432 = vmatprep.subr.mxu0 0.0
    %433 = vmatpush1.msra.mxu0 0.0
    %434 = vmatprep.subr.mxu0 0.0
    %435 = vmatpush1.msra.mxu0 0.0
    %436 = vmatprep.subr.mxu0 0.0
    %437 = vmatpush1.msra.mxu0 0.0
    %438 = vmatprep.subr.mxu0 0.0
    %439 = vmatpush1.msra.mxu0 0.0
    %440 = vmatprep.subr.mxu0 0.0
    %441 = vmatpush1.msra.mxu0 0.0
    %442 = vmatprep.subr.mxu0 0.0
    %443 = vmatpush1.msra.mxu0 0.0
    %444 = vmatprep.subr.mxu0 0.0
    %445 = vmatpush1.msra.mxu0 0.0
    %446 = vmatprep.subr.mxu0 0.0
    %447 = vmatpush1.msra.mxu0 0.0
    %448 = vmatprep.subr.mxu0 0.0
    %449 = vmatpush1.msra.mxu0 0.0
    %450 = vmatprep.subr.mxu0 0.0
    %451 = vmatpush1.msra.mxu0 0.0
    %452 = vmatprep.mubr.f32.mxu0 0.0
    %453 = vmatmul.mubr.f32.gmra.mrb[0].mxu0 %v364
    %v454 = vpop.f32.mrb[0].mxu0
    %v455 = vadd.f32 %v386, %v454
    %v456 = vpop.f32.mrb[0].mxu0
    %457 = vdwg.mxu0
    %v458 = vmax.f32 %v455, 0.0
    %v459 = vld [vmem:[#allocation7] sm:$0xff]
    %v460 = vld [vmem:[#allocation7 + $0x8] sm:$0xff]
    %v461 = vld [vmem:[#allocation7 + $0x10] sm:$0xff]
    %v462 = vld [vmem:[#allocation7 + $0x18] sm:$0xff]
    %v463 = vld [vmem:[#allocation7 + $0x20] sm:$0xff]
    %v464 = vld [vmem:[#allocation7 + $0x28] sm:$0xff]
    %v465 = vld [vmem:[#allocation7 + $0x30] sm:$0xff]
    %v466 = vld [vmem:[#allocation7 + $0x38] sm:$0xff]
    %v467 = vld [vmem:[#allocation7 + $0x40] sm:$0xff]
    %v468 = vld [vmem:[#allocation7 + $0x48] sm:$0xff]
    %v469 = vld [vmem:[#allocation7 + $0x50] sm:$0xff]
    %v470 = vld [vmem:[#allocation7 + $0x58] sm:$0xff]
    %v471 = vld [vmem:[#allocation7 + $0x60] sm:$0xff]
    %v472 = vld [vmem:[#allocation7 + $0x68] sm:$0xff]
    %v473 = vld [vmem:[#allocation7 + $0x70] sm:$0xff]
    %v474 = vld [vmem:[#allocation7 + $0x78] sm:$0xff]
    %v475 = vld [vmem:[%s10] sm:$0x1]
    %v477 = vlaneseq
    %v478 = vshrl.u32 %v477, 7
    %v479 = vsub.s32 0, %v478
    %v480 = vrot.slane %v475, %v479
    %482 = vmatprep.subr.mxu0 0.0
    %483 = vmatpush1.msra.mxu0 %v459
    %484 = vmatprep.subr.mxu0 0.0
    %485 = vmatpush1.msra.mxu0 %v460
    %486 = vmatprep.subr.mxu0 0.0
    %487 = vmatpush1.msra.mxu0 %v461
    %488 = vmatprep.subr.mxu0 0.0
    %489 = vmatpush1.msra.mxu0 %v462
    %490 = vmatprep.subr.mxu0 0.0
    %491 = vmatpush1.msra.mxu0 %v463
    %492 = vmatprep.subr.mxu0 0.0
    %493 = vmatpush1.msra.mxu0 %v464
    %494 = vmatprep.subr.mxu0 0.0
    %495 = vmatpush1.msra.mxu0 %v465
    %496 = vmatprep.subr.mxu0 0.0
    %497 = vmatpush1.msra.mxu0 %v466
    %498 = vmatprep.subr.mxu0 0.0
    %499 = vmatpush1.msra.mxu0 %v467
    %500 = vmatprep.subr.mxu0 0.0
    %501 = vmatpush1.msra.mxu0 %v468
    %502 = vmatprep.subr.mxu0 0.0
    %503 = vmatpush1.msra.mxu0 %v469
    %504 = vmatprep.subr.mxu0 0.0
    %505 = vmatpush1.msra.mxu0 %v470
    %506 = vmatprep.subr.mxu0 0.0
    %507 = vmatpush1.msra.mxu0 %v471
    %508 = vmatprep.subr.mxu0 0.0
    %509 = vmatpush1.msra.mxu0 %v472
    %510 = vmatprep.subr.mxu0 0.0
    %511 = vmatpush1.msra.mxu0 %v473
    %512 = vmatprep.subr.mxu0 0.0
    %513 = vmatpush1.msra.mxu0 %v474
    %514 = vmatprep.subr.mxu0 0.0
    %515 = vmatpush1.msra.mxu0 0.0
    %516 = vmatprep.subr.mxu0 0.0
    %517 = vmatpush1.msra.mxu0 0.0
    %518 = vmatprep.subr.mxu0 0.0
    %519 = vmatpush1.msra.mxu0 0.0
    %520 = vmatprep.subr.mxu0 0.0
    %521 = vmatpush1.msra.mxu0 0.0
    %522 = vmatprep.subr.mxu0 0.0
    %523 = vmatpush1.msra.mxu0 0.0
    %524 = vmatprep.subr.mxu0 0.0
    %525 = vmatpush1.msra.mxu0 0.0
    %526 = vmatprep.subr.mxu0 0.0
    %527 = vmatpush1.msra.mxu0 0.0
    %528 = vmatprep.subr.mxu0 0.0
    %529 = vmatpush1.msra.mxu0 0.0
    %530 = vmatprep.subr.mxu0 0.0
    %531 = vmatpush1.msra.mxu0 0.0
    %532 = vmatprep.subr.mxu0 0.0
    %533 = vmatpush1.msra.mxu0 0.0
    %534 = vmatprep.subr.mxu0 0.0
    %535 = vmatpush1.msra.mxu0 0.0
    %536 = vmatprep.subr.mxu0 0.0
    %537 = vmatpush1.msra.mxu0 0.0
    %538 = vmatprep.subr.mxu0 0.0
    %539 = vmatpush1.msra.mxu0 0.0
    %540 = vmatprep.subr.mxu0 0.0
    %541 = vmatpush1.msra.mxu0 0.0
    %542 = vmatprep.subr.mxu0 0.0
    %543 = vmatpush1.msra.mxu0 0.0
    %544 = vmatprep.subr.mxu0 0.0
    %545 = vmatpush1.msra.mxu0 0.0
    %546 = vmatprep.mubr.f32.mxu0 0.0
    %547 = vmatmul.mubr.f32.gmra.mrb[0].mxu0 %v458
    %v548 = vpop.f32.mrb[0].mxu0
    %v549 = vadd.f32 %v480, %v548
    %v550 = vpop.f32.mrb[0].mxu0
    %551 = vdwg.mxu0
    %v552 = vmax.f32 %v549, 0.0
    %v553 = vld [vmem:[%s11] sm:$0xff]
    %v554 = vld [vmem:[%s11 + $0x8] sm:$0xff]
    %v555 = vld [vmem:[%s11 + $0x10] sm:$0xff]
    %v556 = vld [vmem:[%s11 + $0x18] sm:$0xff]
    %v557 = vld [vmem:[%s11 + $0x20] sm:$0xff]
    %v558 = vld [vmem:[%s11 + $0x28] sm:$0xff]
    %v559 = vld [vmem:[%s11 + $0x30] sm:$0xff]
    %v560 = vld [vmem:[%s11 + $0x38] sm:$0xff]
    %v561 = vld [vmem:[%s11 + $0x40] sm:$0xff]
    %v562 = vld [vmem:[%s11 + $0x48] sm:$0xff]
    %v563 = vld [vmem:[%s11 + $0x50] sm:$0xff]
    %v564 = vld [vmem:[%s11 + $0x58] sm:$0xff]
    %v565 = vld [vmem:[%s11 + $0x60] sm:$0xff]
    %v566 = vld [vmem:[%s11 + $0x68] sm:$0xff]
    %v567 = vld [vmem:[%s11 + $0x70] sm:$0xff]
    %v568 = vld [vmem:[%s11 + $0x78] sm:$0xff]
    %v569 = vld [vmem:[%s12] sm:$0x1]
    %v571 = vlaneseq
    %v572 = vshrl.u32 %v571, 7
    %v573 = vsub.s32 0, %v572
    %v574 = vrot.slane %v569, %v573
    %576 = vmatprep.subr.mxu0 0.0
    %577 = vmatpush1.msra.mxu0 %v553
    %578 = vmatprep.subr.mxu0 0.0
    %579 = vmatpush1.msra.mxu0 %v554
    %580 = vmatprep.subr.mxu0 0.0
    %581 = vmatpush1.msra.mxu0 %v555
    %582 = vmatprep.subr.mxu0 0.0
    %583 = vmatpush1.msra.mxu0 %v556
    %584 = vmatprep.subr.mxu0 0.0
    %585 = vmatpush1.msra.mxu0 %v557
    %586 = vmatprep.subr.mxu0 0.0
    %587 = vmatpush1.msra.mxu0 %v558
    %588 = vmatprep.subr.mxu0 0.0
    %589 = vmatpush1.msra.mxu0 %v559
    %590 = vmatprep.subr.mxu0 0.0
    %591 = vmatpush1.msra.mxu0 %v560
    %592 = vmatprep.subr.mxu0 0.0
    %593 = vmatpush1.msra.mxu0 %v561
    %594 = vmatprep.subr.mxu0 0.0
    %595 = vmatpush1.msra.mxu0 %v562
    %596 = vmatprep.subr.mxu0 0.0
    %597 = vmatpush1.msra.mxu0 %v563
    %598 = vmatprep.subr.mxu0 0.0
    %599 = vmatpush1.msra.mxu0 %v564
    %600 = vmatprep.subr.mxu0 0.0
    %601 = vmatpush1.msra.mxu0 %v565
    %602 = vmatprep.subr.mxu0 0.0
    %603 = vmatpush1.msra.mxu0 %v566
    %604 = vmatprep.subr.mxu0 0.0
    %605 = vmatpush1.msra.mxu0 %v567
    %606 = vmatprep.subr.mxu0 0.0
    %607 = vmatpush1.msra.mxu0 %v568
    %608 = vmatprep.subr.mxu0 0.0
    %609 = vmatpush1.msra.mxu0 0.0
    %610 = vmatprep.subr.mxu0 0.0
    %611 = vmatpush1.msra.mxu0 0.0
    %612 = vmatprep.subr.mxu0 0.0
    %613 = vmatpush1.msra.mxu0 0.0
    %614 = vmatprep.subr.mxu0 0.0
    %615 = vmatpush1.msra.mxu0 0.0
    %616 = vmatprep.subr.mxu0 0.0
    %617 = vmatpush1.msra.mxu0 0.0
    %618 = vmatprep.subr.mxu0 0.0
    %619 = vmatpush1.msra.mxu0 0.0
    %620 = vmatprep.subr.mxu0 0.0
    %621 = vmatpush1.msra.mxu0 0.0
    %622 = vmatprep.subr.mxu0 0.0
    %623 = vmatpush1.msra.mxu0 0.0
    %624 = vmatprep.subr.mxu0 0.0
    %625 = vmatpush1.msra.mxu0 0.0
    %626 = vmatprep.subr.mxu0 0.0
    %627 = vmatpush1.msra.mxu0 0.0
    %628 = vmatprep.subr.mxu0 0.0
    %629 = vmatpush1.msra.mxu0 0.0
    %630 = vmatprep.subr.mxu0 0.0
    %631 = vmatpush1.msra.mxu0 0.0
    %632 = vmatprep.subr.mxu0 0.0
    %633 = vmatpush1.msra.mxu0 0.0
    %634 = vmatprep.subr.mxu0 0.0
    %635 = vmatpush1.msra.mxu0 0.0
    %636 = vmatprep.subr.mxu0 0.0
    %637 = vmatpush1.msra.mxu0 0.0
    %638 = vmatprep.subr.mxu0 0.0
    %639 = vmatpush1.msra.mxu0 0.0
    %640 = vmatprep.mubr.f32.mxu0 0.0
    %641 = vmatmul.mubr.f32.gmra.mrb[0].mxu0 %v552
    %v642 = vpop.f32.mrb[0].mxu0
    %v643 = vadd.f32 %v574, %v642
    %v644 = vpop.f32.mrb[0].mxu0
    %645 = vdwg.mxu0
    %646 = vst.msk [vmem:[#allocation8] sm:$0xff] %vm102, %v643
    // Predicated region
    $region66: #{tpu_custom_call.1} parent=1 // pred_check
      _
    $region67: #{tpu_custom_call.1} parent=1 // pred_check_branch
      %648 = sbr.rel (0) target = $region69
    $region68: #{tpu_custom_call.1} parent=1 // pred_region
      %s650 = ssub.s32 128, 128
      %651 = vsyncadd [#allocation4], %s650
      %s653 = sshll.u32 [#allocation8], 4
      %s654 = int_to_ptr.vmem [resolvable:$true] %s653
      %656 = dma.vmem_to_hbm [thread:$0]  %s654, 128, %s13, [#allocation4]
    $region69: #{tpu_custom_call.1} parent=1 // pred_fallthru
      _
    // Predicated region
    $region70: #{tpu_custom_call.1} parent=1 // pred_check
      _
    $region71: #{tpu_custom_call.1} parent=1 // pred_check_branch
      %658 = sbr.rel (0) target = $region73
    $region72: #{tpu_custom_call.1} parent=1 // pred_region
      %659 = dma.done [#allocation4], 128
    $region73: #{tpu_custom_call.1} parent=1 // pred_fallthru
      _
    %660 = vsyncpa [#allocation3], 1
    %661 = vsyncpa [#allocation6], 1
    %662 = vsyncpa [#allocation4], 1

</llo_original>
